<compile_context>
chip_gen: v6e
topology: v6e:2x2x1
jax: 0.10.0
libtpu: 0.0.40
codegen_flags: <defaults>
</compile_context>

<pallas_src>
import jax
import jax.numpy as jnp
from jax import lax
from jax.experimental import pallas as pl
from jax.experimental.pallas import tpu as pltpu


def _decoder_kernel(inp_ref, h_ref, c_ref, w_ref, b_ref,
                    out_ref, hc_out_ref, xh_scratch):
    """Single invocation == one decode time-step through all stacked LSTM layers.

    Ref shapes (all whole arrays, VMEM resident):
      inp_ref    : (N, D_pad)              f32   padded decoder input
      h_ref      : (L, N, H)               f32   previous hidden states
      c_ref      : (L, N, H)               f32   previous cell states
      w_ref      : (L, D_pad + H, 4H)      bf16  [W_ih^T ; W_hh^T], zero-padded rows
      b_ref      : (L, 1, 4H)              f32   b_ih + b_hh
      out_ref    : (N, H)                  f32   top-layer output
      hc_out_ref : (L, N, 2H)              f32   [h_new | c_new] per layer (lane-dense)
      xh_scratch : (N, D_pad + H)          bf16  carries [x_l | h_l] across layers
    """
    n_layers, N, H = h_ref.shape
    D_pad = inp_ref.shape[-1]

    # Stage the (padded) decoder input once; layers > 0 overwrite the first H cols.
    # (If D_pad > H the trailing input columns keep stale layer-0 values, but the
    #  matching weight rows are zero for layers > 0, so the result is exact.)
    xh_scratch[:, :D_pad] = inp_ref[...].astype(xh_scratch.dtype)

    def layer_body(l, _):
        # Stage this layer's previous hidden state next to its input.
        xh_scratch[:, D_pad:] = h_ref[l].astype(xh_scratch.dtype)

        # One MXU dot per layer: gates = [x | h] @ [W_ih^T ; W_hh^T] + (b_ih + b_hh)
        gates = jnp.dot(xh_scratch[...], w_ref[l],
                        preferred_element_type=jnp.float32) + b_ref[l]

        # Full-width EUP pushes, then slice (torch gate order along 4H: i | f | g | o).
        sg = jax.nn.sigmoid(gates)
        tg = jnp.tanh(gates)
        i_g = sg[:, 0 * H:1 * H]
        f_g = sg[:, 1 * H:2 * H]
        g_g = tg[:, 2 * H:3 * H]
        o_g = sg[:, 3 * H:4 * H]

        c_new = f_g * c_ref[l] + i_g * g_g        # f32 state update
        h_new = o_g * jnp.tanh(c_new)

        # Lane-dense packed writeback: one (N, 2H) store per layer.
        hc_out_ref[l] = jnp.concatenate([h_new, c_new], axis=-1).astype(hc_out_ref.dtype)

        # Feed the next layer: its input is this layer's new hidden state.
        xh_scratch[:, :H] = h_new.astype(xh_scratch.dtype)
        return h_new

    h_top = lax.fori_loop(0, n_layers, layer_body,
                          jnp.zeros((N, H), jnp.float32), unroll=True)

    # Top-layer output written exactly once.
    out_ref[...] = h_top.astype(out_ref.dtype)


@jax.jit
def decoder_tsv_forward(inp, hidden, cell, w_cat, b_cat):
    """Mirrors Decoder_tsv.forward.

    inp:    (batch, input_dim)
    hidden: (n_layers, batch, hidden_dim)
    cell:   (n_layers, batch, hidden_dim)
    w_cat:  (n_layers, D_pad + H, 4H)   bf16, pre-transposed, concatenated, zero-padded
    b_cat:  (n_layers, 1, 4H)           f32, pre-summed biases
    returns (output, (hidden_new, cell_new)); output = top-layer new hidden.
    """
    n_layers, N, H = hidden.shape
    D_pad = w_cat.shape[1] - H
    in_dim = inp.shape[1]

    # Zero-pad input columns up to D_pad = max(input_dim, hidden_dim); the padded
    # weight rows are zero so results are exact.
    inp_p = jnp.zeros((N, D_pad), jnp.float32).at[:, :in_dim].set(inp.astype(jnp.float32))

    vmem_spec = pl.BlockSpec(memory_space=pltpu.MemorySpace.VMEM)

    out, hc_new = pl.pallas_call(
        _decoder_kernel,
        out_shape=(
            jax.ShapeDtypeStruct((N, H), jnp.float32),
            jax.ShapeDtypeStruct((n_layers, N, 2 * H), jnp.float32),
        ),
        in_specs=[vmem_spec] * 5,
        out_specs=(vmem_spec, vmem_spec),
        scratch_shapes=[pltpu.VMEM((N, D_pad + H), jnp.bfloat16)],
        compiler_params=pltpu.CompilerParams(vmem_limit_bytes=32 * 1024 * 1024),
    )(inp_p, hidden, cell, w_cat, b_cat)

    hidden_new = hc_new[..., :H]
    cell_new = hc_new[..., H:]
    return out, (hidden_new, cell_new)


def init_decoder_params(key, input_dim, hidden_dim, n_layers):
    """nn.LSTM-style init U(-1/sqrt(H), 1/sqrt(H)); returns fused (bf16) + raw (f32) params."""
    H = hidden_dim
    bound = 1.0 / float(H) ** 0.5
    D_pad = max(input_dim, hidden_dim)
    w_cat = jnp.zeros((n_layers, D_pad + H, 4 * H), jnp.float32)
    b_cat = jnp.zeros((n_layers, 1, 4 * H), jnp.float32)
    raw = []
    for layer in range(n_layers):
        d_in = input_dim if layer == 0 else hidden_dim
        key, k1, k2, k3, k4 = jax.random.split(key, 5)
        w_ih = jax.random.uniform(k1, (4 * H, d_in), jnp.float32, -bound, bound)
        w_hh = jax.random.uniform(k2, (4 * H, H), jnp.float32, -bound, bound)
        b_ih = jax.random.uniform(k3, (4 * H,), jnp.float32, -bound, bound)
        b_hh = jax.random.uniform(k4, (4 * H,), jnp.float32, -bound, bound)
        w_cat = w_cat.at[layer, :d_in, :].set(w_ih.T)     # input part (zero-padded rows)
        w_cat = w_cat.at[layer, D_pad:, :].set(w_hh.T)    # hidden part
        b_cat = b_cat.at[layer, 0, :].set(b_ih + b_hh)
        raw.append({"w_ih": w_ih, "w_hh": w_hh, "b_ih": b_ih, "b_hh": b_hh})
    return w_cat.astype(jnp.bfloat16), b_cat, raw


def _reference_forward(inp, hidden, cell, raw_params):
    """Pure-JAX reference with bf16-quantized matmul inputs (matching kernel precision)."""
    H = hidden.shape[-1]

    def q(x):  # bf16 quantization, values exactly representable in f32
        return x.astype(jnp.bfloat16).astype(jnp.float32)

    x = inp
    new_h, new_c = [], []
    for layer, p in enumerate(raw_params):
        gates = (jnp.dot(q(x), q(p["w_ih"]).T, precision=lax.Precision.HIGHEST)
                 + jnp.dot(q(hidden[layer]), q(p["w_hh"]).T, precision=lax.Precision.HIGHEST)
                 + p["b_ih"] + p["b_hh"])
        i_g = jax.nn.sigmoid(gates[:, 0 * H:1 * H])
        f_g = jax.nn.sigmoid(gates[:, 1 * H:2 * H])
        g_g = jnp.tanh(gates[:, 2 * H:3 * H])
        o_g = jax.nn.sigmoid(gates[:, 3 * H:4 * H])
        c_l = f_g * cell[layer] + i_g * g_g
        h_l = o_g * jnp.tanh(c_l)
        new_h.append(h_l)
        new_c.append(c_l)
        x = h_l
    return x, (jnp.stack(new_h, 0), jnp.stack(new_c, 0))


if __name__ == "__main__":
    # Small shapes consistent with the module's forward.
    batch = 8
    input_dim = 32     # == output_dim
    hidden_dim = 32
    n_layers = 3
    p_dropout = 0.1    # unused in eval-mode forward

    key = jax.random.PRNGKey(0)
    key, k_in, k_h, k_c, k_params = jax.random.split(key, 5)

    inp = jax.random.normal(k_in, (batch, input_dim), jnp.float32)
    hidden = jax.random.normal(k_h, (n_layers, batch, hidden_dim), jnp.float32)
    cell = jax.random.normal(k_c, (n_layers, batch, hidden_dim), jnp.float32)

    w_cat, b_cat, raw_params = init_decoder_params(k_params, input_dim, hidden_dim, n_layers)

    out, (h_new, c_new) = decoder_tsv_forward(inp, hidden, cell, w_cat, b_cat)
    out = jax.block_until_ready(out)
    h_new = jax.block_until_ready(h_new)
    c_new = jax.block_until_ready(c_new)

    # Correctness check against the bf16-quantized pure-JAX reference.
    out_ref, (h_ref, c_ref) = _reference_forward(inp, hidden, cell, raw_params)
    assert out.shape == (batch, hidden_dim)
    assert h_new.shape == (n_layers, batch, hidden_dim)
    assert c_new.shape == (n_layers, batch, hidden_dim)
    assert jnp.allclose(out, out_ref, atol=5e-3, rtol=5e-3)
    assert jnp.allclose(h_new, h_ref, atol=5e-3, rtol=5e-3)
    assert jnp.allclose(c_new, c_ref, atol=5e-3, rtol=5e-3)

    print("KERNEL_OK")
</pallas_src>

<mosaic_0001>
module attributes {stable_mosaic.version = 11 : i64} {
  func.func @_decoder_kernel(%arg0: memref<8x32xf32, #tpu.memory_space<vmem>>, %arg1: memref<3x8x32xf32, #tpu.memory_space<vmem>>, %arg2: memref<3x8x32xf32, #tpu.memory_space<vmem>>, %arg3: memref<3x64x128xbf16, #tpu.memory_space<vmem>>, %arg4: memref<3x1x128xf32, #tpu.memory_space<vmem>>, %arg5: memref<8x32xf32, #tpu.memory_space<vmem>>, %arg6: memref<3x8x64xf32, #tpu.memory_space<vmem>>, %arg7: memref<8x64xbf16, #tpu.memory_space<vmem>>) attributes {dimension_semantics = [], scalar_prefetch = 0 : i64, scratch_operands = 1 : i64, tpu.core_type = #tpu.core_type<tc>} {
    %c0 = arith.constant 0 : index
    %c0_0 = arith.constant 0 : index
    %0 = vector.load %arg0[%c0, %c0_0] : memref<8x32xf32, #tpu.memory_space<vmem>>, vector<8x32xf32>
    %1 = arith.truncf %0 : vector<8x32xf32> to vector<8x32xbf16>
    %c0_1 = arith.constant 0 : index
    %c0_2 = arith.constant 0 : index
    %2 = vector.load %arg7[%c0_1, %c0_2] : memref<8x64xbf16, #tpu.memory_space<vmem>>, vector<8x32xbf16>
    tpu.vector_store %arg7[%c0_1, %c0_2], %1 {strides = array<i32>} : memref<8x64xbf16, #tpu.memory_space<vmem>>, vector<8x32xbf16>,
    %cst = arith.constant 0.000000e+00 : f32
    %3 = vector.broadcast %cst : f32 to vector<8x32xf32>
    %c0_i32 = arith.constant 0 : i32
    %4 = arith.index_cast %c0_i32 : i32 to index
    %c0_3 = arith.constant 0 : index
    %c0_4 = arith.constant 0 : index
    %5 = vector.load %arg1[%4, %c0_3, %c0_4] : memref<3x8x32xf32, #tpu.memory_space<vmem>>, vector<1x8x32xf32>
    %6 = vector.shape_cast %5 : vector<1x8x32xf32> to vector<8x32xf32>
    %7 = arith.truncf %6 : vector<8x32xf32> to vector<8x32xbf16>
    %c0_5 = arith.constant 0 : index
    %c32 = arith.constant 32 : index
    %8 = vector.load %arg7[%c0_5, %c32] : memref<8x64xbf16, #tpu.memory_space<vmem>>, vector<8x32xbf16>
    tpu.vector_store %arg7[%c0_5, %c32], %7 {strides = array<i32>} : memref<8x64xbf16, #tpu.memory_space<vmem>>, vector<8x32xbf16>,
    %c0_6 = arith.constant 0 : index
    %c0_7 = arith.constant 0 : index
    %9 = vector.load %arg7[%c0_6, %c0_7] : memref<8x64xbf16, #tpu.memory_space<vmem>>, vector<8x64xbf16>
    %10 = arith.index_cast %c0_i32 : i32 to index
    %c0_8 = arith.constant 0 : index
    %c0_9 = arith.constant 0 : index
    %11 = vector.load %arg3[%10, %c0_8, %c0_9] : memref<3x64x128xbf16, #tpu.memory_space<vmem>>, vector<1x64x128xbf16>
    %12 = vector.shape_cast %11 : vector<1x64x128xbf16> to vector<64x128xbf16>
    %cst_10 = arith.constant dense<0.000000e+00> : vector<8x128xf32>
    %13 = tpu.matmul %9, %12, %cst_10 {dimension_numbers = #tpu.dot_dimension_numbers<[1], [0], [0], [1], [0, 0, 1, 1], [], []>} : vector<8x64xbf16>, vector<64x128xbf16>, vector<8x128xf32> -> vector<8x128xf32>
    %14 = arith.index_cast %c0_i32 : i32 to index
    %c0_11 = arith.constant 0 : index
    %c0_12 = arith.constant 0 : index
    %15 = vector.load %arg4[%14, %c0_11, %c0_12] : memref<3x1x128xf32, #tpu.memory_space<vmem>>, vector<1x1x128xf32>
    %16 = vector.shape_cast %15 : vector<1x1x128xf32> to vector<1x128xf32>
    %17 = vector.broadcast %16 : vector<1x128xf32> to vector<8x128xf32>
    %18 = arith.addf %13, %17 : vector<8x128xf32>
    %19 = arith.negf %18 : vector<8x128xf32>
    %20 = math.exp %19 : vector<8x128xf32>
    %cst_13 = arith.constant 1.000000e+00 : f32
    %21 = vector.broadcast %cst_13 : f32 to vector<8x128xf32>
    %22 = arith.addf %21, %20 : vector<8x128xf32>
    %23 = arith.divf %21, %22 : vector<8x128xf32>
    %24 = math.tanh %18 : vector<8x128xf32>
    %25 = vector.extract_strided_slice %23 {offsets = [0, 0], sizes = [8, 32], strides = [1, 1]} : vector<8x128xf32> to vector<8x32xf32>
    %26 = vector.extract_strided_slice %23 {offsets = [0, 32], sizes = [8, 32], strides = [1, 1]} : vector<8x128xf32> to vector<8x32xf32>
    %27 = vector.extract_strided_slice %24 {offsets = [0, 64], sizes = [8, 32], strides = [1, 1]} : vector<8x128xf32> to vector<8x32xf32>
    %28 = vector.extract_strided_slice %23 {offsets = [0, 96], sizes = [8, 32], strides = [1, 1]} : vector<8x128xf32> to vector<8x32xf32>
    %29 = arith.index_cast %c0_i32 : i32 to index
    %c0_14 = arith.constant 0 : index
    %c0_15 = arith.constant 0 : index
    %30 = vector.load %arg2[%29, %c0_14, %c0_15] : memref<3x8x32xf32, #tpu.memory_space<vmem>>, vector<1x8x32xf32>
    %31 = vector.shape_cast %30 : vector<1x8x32xf32> to vector<8x32xf32>
    %32 = arith.mulf %26, %31 : vector<8x32xf32>
    %33 = arith.mulf %25, %27 : vector<8x32xf32>
    %34 = arith.addf %32, %33 : vector<8x32xf32>
    %35 = math.tanh %34 : vector<8x32xf32>
    %36 = arith.mulf %28, %35 : vector<8x32xf32>
    %37 = tpu.concatenate %36, %34 in 1 : vector<8x32xf32>, vector<8x32xf32> -> vector<8x64xf32>
    %38 = arith.index_cast %c0_i32 : i32 to index
    %c0_16 = arith.constant 0 : index
    %c0_17 = arith.constant 0 : index
    %39 = vector.load %arg6[%38, %c0_16, %c0_17] : memref<3x8x64xf32, #tpu.memory_space<vmem>>, vector<1x8x64xf32>
    %40 = vector.shape_cast %39 : vector<1x8x64xf32> to vector<8x64xf32>
    %41 = vector.shape_cast %37 : vector<8x64xf32> to vector<1x8x64xf32>
    tpu.vector_store %arg6[%38, %c0_16, %c0_17], %41 {strides = array<i32>} : memref<3x8x64xf32, #tpu.memory_space<vmem>>, vector<1x8x64xf32>,
    %42 = arith.truncf %36 : vector<8x32xf32> to vector<8x32xbf16>
    %c0_18 = arith.constant 0 : index
    %c0_19 = arith.constant 0 : index
    %43 = vector.load %arg7[%c0_18, %c0_19] : memref<8x64xbf16, #tpu.memory_space<vmem>>, vector<8x32xbf16>
    tpu.vector_store %arg7[%c0_18, %c0_19], %42 {strides = array<i32>} : memref<8x64xbf16, #tpu.memory_space<vmem>>, vector<8x32xbf16>,
    %c1_i32 = arith.constant 1 : i32
    %44 = arith.index_cast %c1_i32 : i32 to index
    %c0_20 = arith.constant 0 : index
    %c0_21 = arith.constant 0 : index
    %45 = vector.load %arg1[%44, %c0_20, %c0_21] : memref<3x8x32xf32, #tpu.memory_space<vmem>>, vector<1x8x32xf32>
    %46 = vector.shape_cast %45 : vector<1x8x32xf32> to vector<8x32xf32>
    %47 = arith.truncf %46 : vector<8x32xf32> to vector<8x32xbf16>
    %c0_22 = arith.constant 0 : index
    %c32_23 = arith.constant 32 : index
    %48 = vector.load %arg7[%c0_22, %c32_23] : memref<8x64xbf16, #tpu.memory_space<vmem>>, vector<8x32xbf16>
    tpu.vector_store %arg7[%c0_22, %c32_23], %47 {strides = array<i32>} : memref<8x64xbf16, #tpu.memory_space<vmem>>, vector<8x32xbf16>,
    %c0_24 = arith.constant 0 : index
    %c0_25 = arith.constant 0 : index
    %49 = vector.load %arg7[%c0_24, %c0_25] : memref<8x64xbf16, #tpu.memory_space<vmem>>, vector<8x64xbf16>
    %50 = arith.index_cast %c1_i32 : i32 to index
    %c0_26 = arith.constant 0 : index
    %c0_27 = arith.constant 0 : index
    %51 = vector.load %arg3[%50, %c0_26, %c0_27] : memref<3x64x128xbf16, #tpu.memory_space<vmem>>, vector<1x64x128xbf16>
    %52 = vector.shape_cast %51 : vector<1x64x128xbf16> to vector<64x128xbf16>
    %cst_28 = arith.constant dense<0.000000e+00> : vector<8x128xf32>
    %53 = tpu.matmul %49, %52, %cst_28 {dimension_numbers = #tpu.dot_dimension_numbers<[1], [0], [0], [1], [0, 0, 1, 1], [], []>} : vector<8x64xbf16>, vector<64x128xbf16>, vector<8x128xf32> -> vector<8x128xf32>
    %54 = arith.index_cast %c1_i32 : i32 to index
    %c0_29 = arith.constant 0 : index
    %c0_30 = arith.constant 0 : index
    %55 = vector.load %arg4[%54, %c0_29, %c0_30] : memref<3x1x128xf32, #tpu.memory_space<vmem>>, vector<1x1x128xf32>
    %56 = vector.shape_cast %55 : vector<1x1x128xf32> to vector<1x128xf32>
    %57 = vector.broadcast %56 : vector<1x128xf32> to vector<8x128xf32>
    %58 = arith.addf %53, %57 : vector<8x128xf32>
    %59 = arith.negf %58 : vector<8x128xf32>
    %60 = math.exp %59 : vector<8x128xf32>
    %cst_31 = arith.constant 1.000000e+00 : f32
    %61 = vector.broadcast %cst_31 : f32 to vector<8x128xf32>
    %62 = arith.addf %61, %60 : vector<8x128xf32>
    %63 = arith.divf %61, %62 : vector<8x128xf32>
    %64 = math.tanh %58 : vector<8x128xf32>
    %65 = vector.extract_strided_slice %63 {offsets = [0, 0], sizes = [8, 32], strides = [1, 1]} : vector<8x128xf32> to vector<8x32xf32>
    %66 = vector.extract_strided_slice %63 {offsets = [0, 32], sizes = [8, 32], strides = [1, 1]} : vector<8x128xf32> to vector<8x32xf32>
    %67 = vector.extract_strided_slice %64 {offsets = [0, 64], sizes = [8, 32], strides = [1, 1]} : vector<8x128xf32> to vector<8x32xf32>
    %68 = vector.extract_strided_slice %63 {offsets = [0, 96], sizes = [8, 32], strides = [1, 1]} : vector<8x128xf32> to vector<8x32xf32>
    %69 = arith.index_cast %c1_i32 : i32 to index
    %c0_32 = arith.constant 0 : index
    %c0_33 = arith.constant 0 : index
    %70 = vector.load %arg2[%69, %c0_32, %c0_33] : memref<3x8x32xf32, #tpu.memory_space<vmem>>, vector<1x8x32xf32>
    %71 = vector.shape_cast %70 : vector<1x8x32xf32> to vector<8x32xf32>
    %72 = arith.mulf %66, %71 : vector<8x32xf32>
    %73 = arith.mulf %65, %67 : vector<8x32xf32>
    %74 = arith.addf %72, %73 : vector<8x32xf32>
    %75 = math.tanh %74 : vector<8x32xf32>
    %76 = arith.mulf %68, %75 : vector<8x32xf32>
    %77 = tpu.concatenate %76, %74 in 1 : vector<8x32xf32>, vector<8x32xf32> -> vector<8x64xf32>
    %78 = arith.index_cast %c1_i32 : i32 to index
    %c0_34 = arith.constant 0 : index
    %c0_35 = arith.constant 0 : index
    %79 = vector.load %arg6[%78, %c0_34, %c0_35] : memref<3x8x64xf32, #tpu.memory_space<vmem>>, vector<1x8x64xf32>
    %80 = vector.shape_cast %79 : vector<1x8x64xf32> to vector<8x64xf32>
    %81 = vector.shape_cast %77 : vector<8x64xf32> to vector<1x8x64xf32>
    tpu.vector_store %arg6[%78, %c0_34, %c0_35], %81 {strides = array<i32>} : memref<3x8x64xf32, #tpu.memory_space<vmem>>, vector<1x8x64xf32>,
    %82 = arith.truncf %76 : vector<8x32xf32> to vector<8x32xbf16>
    %c0_36 = arith.constant 0 : index
    %c0_37 = arith.constant 0 : index
    %83 = vector.load %arg7[%c0_36, %c0_37] : memref<8x64xbf16, #tpu.memory_space<vmem>>, vector<8x32xbf16>
    tpu.vector_store %arg7[%c0_36, %c0_37], %82 {strides = array<i32>} : memref<8x64xbf16, #tpu.memory_space<vmem>>, vector<8x32xbf16>,
    %c2_i32 = arith.constant 2 : i32
    %84 = arith.index_cast %c2_i32 : i32 to index
    %c0_38 = arith.constant 0 : index
    %c0_39 = arith.constant 0 : index
    %85 = vector.load %arg1[%84, %c0_38, %c0_39] : memref<3x8x32xf32, #tpu.memory_space<vmem>>, vector<1x8x32xf32>
    %86 = vector.shape_cast %85 : vector<1x8x32xf32> to vector<8x32xf32>
    %87 = arith.truncf %86 : vector<8x32xf32> to vector<8x32xbf16>
    %c0_40 = arith.constant 0 : index
    %c32_41 = arith.constant 32 : index
    %88 = vector.load %arg7[%c0_40, %c32_41] : memref<8x64xbf16, #tpu.memory_space<vmem>>, vector<8x32xbf16>
    tpu.vector_store %arg7[%c0_40, %c32_41], %87 {strides = array<i32>} : memref<8x64xbf16, #tpu.memory_space<vmem>>, vector<8x32xbf16>,
    %c0_42 = arith.constant 0 : index
    %c0_43 = arith.constant 0 : index
    %89 = vector.load %arg7[%c0_42, %c0_43] : memref<8x64xbf16, #tpu.memory_space<vmem>>, vector<8x64xbf16>
    %90 = arith.index_cast %c2_i32 : i32 to index
    %c0_44 = arith.constant 0 : index
    %c0_45 = arith.constant 0 : index
    %91 = vector.load %arg3[%90, %c0_44, %c0_45] : memref<3x64x128xbf16, #tpu.memory_space<vmem>>, vector<1x64x128xbf16>
    %92 = vector.shape_cast %91 : vector<1x64x128xbf16> to vector<64x128xbf16>
    %cst_46 = arith.constant dense<0.000000e+00> : vector<8x128xf32>
    %93 = tpu.matmul %89, %92, %cst_46 {dimension_numbers = #tpu.dot_dimension_numbers<[1], [0], [0], [1], [0, 0, 1, 1], [], []>} : vector<8x64xbf16>, vector<64x128xbf16>, vector<8x128xf32> -> vector<8x128xf32>
    %94 = arith.index_cast %c2_i32 : i32 to index
    %c0_47 = arith.constant 0 : index
    %c0_48 = arith.constant 0 : index
    %95 = vector.load %arg4[%94, %c0_47, %c0_48] : memref<3x1x128xf32, #tpu.memory_space<vmem>>, vector<1x1x128xf32>
    %96 = vector.shape_cast %95 : vector<1x1x128xf32> to vector<1x128xf32>
    %97 = vector.broadcast %96 : vector<1x128xf32> to vector<8x128xf32>
    %98 = arith.addf %93, %97 : vector<8x128xf32>
    %99 = arith.negf %98 : vector<8x128xf32>
    %100 = math.exp %99 : vector<8x128xf32>
    %cst_49 = arith.constant 1.000000e+00 : f32
    %101 = vector.broadcast %cst_49 : f32 to vector<8x128xf32>
    %102 = arith.addf %101, %100 : vector<8x128xf32>
    %103 = arith.divf %101, %102 : vector<8x128xf32>
    %104 = math.tanh %98 : vector<8x128xf32>
    %105 = vector.extract_strided_slice %103 {offsets = [0, 0], sizes = [8, 32], strides = [1, 1]} : vector<8x128xf32> to vector<8x32xf32>
    %106 = vector.extract_strided_slice %103 {offsets = [0, 32], sizes = [8, 32], strides = [1, 1]} : vector<8x128xf32> to vector<8x32xf32>
    %107 = vector.extract_strided_slice %104 {offsets = [0, 64], sizes = [8, 32], strides = [1, 1]} : vector<8x128xf32> to vector<8x32xf32>
    %108 = vector.extract_strided_slice %103 {offsets = [0, 96], sizes = [8, 32], strides = [1, 1]} : vector<8x128xf32> to vector<8x32xf32>
    %109 = arith.index_cast %c2_i32 : i32 to index
    %c0_50 = arith.constant 0 : index
    %c0_51 = arith.constant 0 : index
    %110 = vector.load %arg2[%109, %c0_50, %c0_51] : memref<3x8x32xf32, #tpu.memory_space<vmem>>, vector<1x8x32xf32>
    %111 = vector.shape_cast %110 : vector<1x8x32xf32> to vector<8x32xf32>
    %112 = arith.mulf %106, %111 : vector<8x32xf32>
    %113 = arith.mulf %105, %107 : vector<8x32xf32>
    %114 = arith.addf %112, %113 : vector<8x32xf32>
    %115 = math.tanh %114 : vector<8x32xf32>
    %116 = arith.mulf %108, %115 : vector<8x32xf32>
    %117 = tpu.concatenate %116, %114 in 1 : vector<8x32xf32>, vector<8x32xf32> -> vector<8x64xf32>
    %118 = arith.index_cast %c2_i32 : i32 to index
    %c0_52 = arith.constant 0 : index
    %c0_53 = arith.constant 0 : index
    %119 = vector.load %arg6[%118, %c0_52, %c0_53] : memref<3x8x64xf32, #tpu.memory_space<vmem>>, vector<1x8x64xf32>
    %120 = vector.shape_cast %119 : vector<1x8x64xf32> to vector<8x64xf32>
    %121 = vector.shape_cast %117 : vector<8x64xf32> to vector<1x8x64xf32>
    tpu.vector_store %arg6[%118, %c0_52, %c0_53], %121 {strides = array<i32>} : memref<3x8x64xf32, #tpu.memory_space<vmem>>, vector<1x8x64xf32>,
    %122 = arith.truncf %116 : vector<8x32xf32> to vector<8x32xbf16>
    %c0_54 = arith.constant 0 : index
    %c0_55 = arith.constant 0 : index
    %123 = vector.load %arg7[%c0_54, %c0_55] : memref<8x64xbf16, #tpu.memory_space<vmem>>, vector<8x32xbf16>
    tpu.vector_store %arg7[%c0_54, %c0_55], %122 {strides = array<i32>} : memref<8x64xbf16, #tpu.memory_space<vmem>>, vector<8x32xbf16>,
    %c3_i32 = arith.constant 3 : i32
    %c0_56 = arith.constant 0 : index
    %c0_57 = arith.constant 0 : index
    %124 = vector.load %arg5[%c0_56, %c0_57] : memref<8x32xf32, #tpu.memory_space<vmem>>, vector<8x32xf32>
    tpu.vector_store %arg5[%c0_56, %c0_57], %116 {strides = array<i32>} : memref<8x32xf32, #tpu.memory_space<vmem>>, vector<8x32xf32>,
    return
  }
}

</mosaic_0001>

<llo_original>
// kernel: decoder_tsv_forward.1
$region0: #{decoder_tsv_forward.1}
  #allocation0 [shape = 'u32[]', space=smem, size = 0x4, offset = 0x4, fixed_abs, tag = 'smem constant byte address 0x4 - core index']
  #allocation1 [shape = 'u32[144,128]{1,0:T(1,128)}', space=vmem, size = 0x12000, scoped, tag = 'internal scratch']
  #allocation2 [shape = 'bf16[8,64]{1,0:T(8,128)(2,1)}', space=vmem, size = 0x800, scoped, tag = 'scratch operand']
  %s0 = inlined_call_operand.hbm [shape: f32[8,32], index: 0, kind: input, shape index: {}]
  %s1 = inlined_call_operand.hbm [shape: f32[3,8,32], index: 1, kind: input, shape index: {}]
  %s2 = inlined_call_operand.hbm [shape: f32[3,8,32], index: 2, kind: input, shape index: {}]
  %s3 = inlined_call_operand.hbm [shape: bf16[3,64,128], index: 3, kind: input, shape index: {}]
  %s4 = inlined_call_operand.vmem [shape: f32[3,1,128], index: 4, kind: input, shape index: {}]
  %s5 = inlined_call_operand.hbm [shape: f32[8,32], index: 5, kind: output, shape index: {0}]
  %s6 = inlined_call_operand.vmem [shape: f32[3,8,64], index: 6, kind: output, shape index: {1}]
  %7 = xla_tuple %s5, %s6
  %s8 = sld [smem:[#allocation0]]
  $region54: #{decoder_tsv_forward.1} parent=0
    _
  %s10 = ssub.s32 1, %s8
  %s11 = scalar_select 0, %s10, %s8
  $region1: #{decoder_tsv_forward.1} parent=0
    #allocation3 [shape = 'u8[4096]{0}', space=vmem, size = 0x1000, scoped, tag = 'input window, operand 0, single buffered']
    #allocation4 [shape = 's32[1]{0}', space=sflag, size = 0x4, scoped, tag = 'scoped memory for decoder_tsv_forward.1']
    #allocation5 [shape = 's32[1]{0}', space=sflag, size = 0x4, scoped, tag = 'scoped memory for decoder_tsv_forward.1']
    #allocation6 [shape = 'u8[12288]{0}', space=vmem, size = 0x3000, scoped, tag = 'input window, operand 1, single buffered']
    #allocation7 [shape = 's32[1]{0}', space=sflag, size = 0x4, scoped, tag = 'scoped memory for decoder_tsv_forward.1']
    #allocation8 [shape = 'u8[12288]{0}', space=vmem, size = 0x3000, scoped, tag = 'input window, operand 2, single buffered']
    #allocation9 [shape = 'u8[49152]{0}', space=vmem, size = 0xc000, scoped, tag = 'input window, operand 3, single buffered']
    #allocation10 [shape = 's32[1]{0}', space=sflag, size = 0x4, scoped, tag = 'scoped memory for decoder_tsv_forward.1']
    #allocation11 [shape = 'u8[4096]{0}', space=vmem, size = 0x1000, scoped, tag = 'output window, operand 0, single buffered']
    %12 = vsyncpa [#allocation4], 0
    %13 = vsyncpa [#allocation7], 0
    %14 = vsyncpa [#allocation10], 0
    %15 = vsyncpa [#allocation5], 0
    // Predicated region
    $region2: #{decoder_tsv_forward.1} parent=1 // pred_check
      _
    $region3: #{decoder_tsv_forward.1} parent=1 // pred_check_branch
      %17 = sbr.rel (0) target = $region5
    $region4: #{decoder_tsv_forward.1} parent=1 // pred_region
      %s19 = ssub.s32 128, 128
      %20 = vsyncadd [#allocation4], %s19
      %s22 = sshll.u32 [#allocation3], 4
      %s23 = int_to_ptr.vmem [resolvable:$true] %s22
      %25 = dma.hbm_to_vmem [thread:$0]  %s0, 128, %s23, [#allocation4]
    $region5: #{decoder_tsv_forward.1} parent=1 // pred_fallthru
      _
    // Predicated region
    $region6: #{decoder_tsv_forward.1} parent=1 // pred_check
      _
    $region7: #{decoder_tsv_forward.1} parent=1 // pred_check_branch
      %27 = sbr.rel (0) target = $region9
    $region8: #{decoder_tsv_forward.1} parent=1 // pred_region
      %s29 = ssub.s32 384, 384
      %30 = vsyncadd [#allocation7], %s29
      %s31 = sshll.u32 [#allocation6], 4
      %s32 = int_to_ptr.vmem [resolvable:$true] %s31
      %37 = dma.hbm_to_vmem [thread:$0]  %s1, 384, %s32, [#allocation7], 128, 128, 8
    $region9: #{decoder_tsv_forward.1} parent=1 // pred_fallthru
      _
    // Predicated region
    $region10: #{decoder_tsv_forward.1} parent=1 // pred_check
      _
    $region11: #{decoder_tsv_forward.1} parent=1 // pred_check_branch
      %39 = sbr.rel (0) target = $region13
    $region12: #{decoder_tsv_forward.1} parent=1 // pred_region
      %s41 = ssub.s32 384, 384
      %42 = vsyncadd [#allocation7], %s41
      %s43 = sshll.u32 [#allocation8], 4
      %s44 = int_to_ptr.vmem [resolvable:$true] %s43
      %49 = dma.hbm_to_vmem [thread:$0]  %s2, 384, %s44, [#allocation7], 128, 128, 8
    $region13: #{decoder_tsv_forward.1} parent=1 // pred_fallthru
      _
    // Predicated region
    $region14: #{decoder_tsv_forward.1} parent=1 // pred_check
      _
    $region15: #{decoder_tsv_forward.1} parent=1 // pred_check_branch
      %51 = sbr.rel (0) target = $region17
    $region16: #{decoder_tsv_forward.1} parent=1 // pred_region
      %s53 = ssub.s32 1536, 1536
      %54 = vsyncadd [#allocation10], %s53
      %s55 = sshll.u32 [#allocation9], 4
      %s56 = int_to_ptr.vmem [resolvable:$true] %s55
      %61 = dma.hbm_to_vmem [thread:$0]  %s3, 1536, %s56, [#allocation10], 64, 64, 4
    $region17: #{decoder_tsv_forward.1} parent=1 // pred_fallthru
      _
    // Predicated region
    $region18: #{decoder_tsv_forward.1} parent=1 // pred_check
      _
    $region19: #{decoder_tsv_forward.1} parent=1 // pred_check_branch
      %63 = sbr.rel (0) target = $region21
    $region20: #{decoder_tsv_forward.1} parent=1 // pred_region
      _
    $region21: #{decoder_tsv_forward.1} parent=1 // pred_fallthru
      _
    // Predicated region
    $region22: #{decoder_tsv_forward.1} parent=1 // pred_check
      _
    $region23: #{decoder_tsv_forward.1} parent=1 // pred_check_branch
      %65 = sbr.rel (0) target = $region25
    $region24: #{decoder_tsv_forward.1} parent=1 // pred_region
      %66 = dma.done [#allocation4], 128
    $region25: #{decoder_tsv_forward.1} parent=1 // pred_fallthru
      _
    // Predicated region
    $region26: #{decoder_tsv_forward.1} parent=1 // pred_check
      _
    $region27: #{decoder_tsv_forward.1} parent=1 // pred_check_branch
      %68 = sbr.rel (0) target = $region29
    $region28: #{decoder_tsv_forward.1} parent=1 // pred_region
      %69 = dma.done [#allocation7], 384
    $region29: #{decoder_tsv_forward.1} parent=1 // pred_fallthru
      _
    // Predicated region
    $region30: #{decoder_tsv_forward.1} parent=1 // pred_check
      _
    $region31: #{decoder_tsv_forward.1} parent=1 // pred_check_branch
      %71 = sbr.rel (0) target = $region33
    $region32: #{decoder_tsv_forward.1} parent=1 // pred_region
      %72 = dma.done [#allocation7], 384
    $region33: #{decoder_tsv_forward.1} parent=1 // pred_fallthru
      _
    // Predicated region
    $region34: #{decoder_tsv_forward.1} parent=1 // pred_check
      _
    $region35: #{decoder_tsv_forward.1} parent=1 // pred_check_branch
      %74 = sbr.rel (0) target = $region37
    $region36: #{decoder_tsv_forward.1} parent=1 // pred_region
      %75 = dma.done [#allocation10], 1536
    $region37: #{decoder_tsv_forward.1} parent=1 // pred_fallthru
      _
    %v77 = vld [vmem:[#allocation3] sm:$0xff]
    %v78 = vpack.c.bf16 %v77, %v77
    %vm79 = vcmask 257024
    %80 = vst.msk [vmem:[#allocation2] sm:$0xf] %vm79, %v78
    %v81 = vld [vmem:[#allocation6] sm:$0xff]
    %v82 = vpack.c.bf16 %v81, %v81
    %v84 = vunpack.c.l.b16 %v82
    %v85 = vpack.c.b16 %v84, %v84
    %86 = vrot.lane.b32.xlu0 %v85, 32
    %v87 = vpop.permute.xlu0 %86
    %vm89 = vcmask 519424
    %90 = vst.msk [vmem:[#allocation2] sm:$0xf] %vm89, %v87
    %v91 = vld [vmem:[#allocation2] sm:$0xf]
    %v92 = vld [vmem:[#allocation9] sm:$0xf]
    %v93 = vld [vmem:[#allocation9 + $0x4] sm:$0xf]
    %v94 = vld [vmem:[#allocation9 + $0x8] sm:$0xf]
    %v95 = vld [vmem:[#allocation9 + $0xc] sm:$0xf]
    %v96 = vld [vmem:[#allocation9 + $0x10] sm:$0xf]
    %v97 = vld [vmem:[#allocation9 + $0x14] sm:$0xf]
    %v98 = vld [vmem:[#allocation9 + $0x18] sm:$0xf]
    %v99 = vld [vmem:[#allocation9 + $0x1c] sm:$0xf]
    %v100 = vld [vmem:[%s4] sm:$0x1]
    %v102 = vlaneseq
    %v103 = vshrl.u32 %v102, 7
    %v104 = vsub.s32 0, %v103
    %v105 = vrot.slane %v100, %v104
    %v115 = vunpack.c.l.b16 %v92
    %v116 = vunpack.c.l.b16 %v93
    %v117 = vunpack.c.l.b16 %v94
    %v118 = vunpack.c.l.b16 %v95
    %v119 = vunpack.c.l.b16 %v96
    %v120 = vunpack.c.l.b16 %v97
    %v121 = vunpack.c.l.b16 %v98
    %v122 = vunpack.c.l.b16 %v99
    %v123 = vpack.c.b16 %v116, %v115
    %v124 = vpack.c.b16 %v118, %v117
    %v125 = vpack.c.b16 %v120, %v119
    %v126 = vpack.c.b16 %v122, %v121
    %vm131 = vcmask 523264
    %v133 = vsel %vm131, %v91, 0
    %135 = vmatprep.subr.bf16.mxu0 0
    %136 = vmatpush1.bf16.msra.mxu0 0
    %137 = vmatprep.subr.bf16.mxu0 0
    %138 = vmatpush1.bf16.msra.mxu0 0
    %139 = vmatprep.subr.bf16.mxu0 0
    %140 = vmatpush1.bf16.msra.mxu0 0
    %141 = vmatprep.subr.bf16.mxu0 0
    %142 = vmatpush1.bf16.msra.mxu0 0
    %143 = vmatprep.subr.bf16.mxu0 0
    %144 = vmatpush1.bf16.msra.mxu0 %v126
    %145 = vmatprep.subr.bf16.mxu0 0
    %146 = vmatpush1.bf16.msra.mxu0 %v125
    %147 = vmatprep.subr.bf16.mxu0 0
    %148 = vmatpush1.bf16.msra.mxu0 %v124
    %149 = vmatprep.subr.bf16.mxu0 0
    %150 = vmatpush1.bf16.msra.mxu0 %v123
    %151 = vmatprep.subr.bf16.mxu0 0
    %152 = vmatpush2.bf16.msra.mxu0 0
    %153 = vmatprep.subr.bf16.mxu0 0
    %154 = vmatpush2.bf16.msra.mxu0 0
    %155 = vmatprep.subr.bf16.mxu0 0
    %156 = vmatpush2.bf16.msra.mxu0 0
    %157 = vmatprep.subr.bf16.mxu0 0
    %158 = vmatpush2.bf16.msra.mxu0 0
    %159 = vmatprep.subr.bf16.mxu0 0
    %160 = vmatpush2.bf16.msra.mxu0 0
    %161 = vmatprep.subr.bf16.mxu0 0
    %162 = vmatpush2.bf16.msra.mxu0 0
    %163 = vmatprep.subr.bf16.mxu0 0
    %164 = vmatpush2.bf16.msra.mxu0 0
    %165 = vmatprep.subr.bf16.mxu0 0
    %166 = vmatpush2.bf16.msra.mxu0 0
    %167 = vmatprep.mubr.bf16.mxu0 0
    %168 = vmatmul.mubr.bf16.gmra.mxu0 %v133
    %v169 = vpop.f32.mrf.mxu0
    %v170 = vadd.f32 %v105, %v169
    %v171 = vpop.f32.mrf.mxu0
    %v172 = vpop.f32.mrf.mxu0
    %v173 = vpop.f32.mrf.mxu0
    %174 = vdwg.mxu0
    %v175 = vxor.u32 %v170, 2147483648
    %v176 = vmul.f32 %v175, 1.442695
    %v177 = vpow.pop %v176
    %v178 = vadd.f32 %v177, 1.0
    %v179 = vrcp.pop %v178
    %v180 = vmul.f32 1.0, %v179
    %v181 = vtanh.pop %v170
    %v182 = vld [vmem:[#allocation8] sm:$0xff]
    %184 = vrot.lane.b32.xlu0 %v182, 32
    %v185 = vpop.permute.xlu0 %184
    %v187 = vmul.f32 %v180, %v185
    %189 = vrot.lane.b32.xlu0 %v181, 64
    %v190 = vpop.permute.xlu0 %189
    %v192 = vmul.f32 %v180, %v190
    %194 = vrot.lane.b32.xlu0 %v192, 32
    %v195 = vpop.permute.xlu0 %194
    %v197 = vadd.f32 %v187, %v195
    %v198 = vtanh.pop %v197
    %200 = vrot.lane.b32.xlu0 %v198, 64
    %v201 = vpop.permute.xlu0 %200
    %v203 = vmul.f32 %v180, %v201
    %205 = vrot.lane.b32.xlu0 %v203, 32
    %v206 = vpop.permute.xlu0 %205
    %vm208 = vcmask 261120
    %v209 = vsel %vm208, %v206, %v197
    %210 = vst.msk [vmem:[%s6] sm:$0xff] %vm131, %v209
    %v211 = vpack.c.bf16 %v203, %v203
    %v213 = vunpack.c.l.b16 %v211
    %v214 = vpack.c.b16 %v213, %v213
    %215 = vrot.lane.b32.xlu0 %v214, 32
    %v216 = vpop.permute.xlu0 %215
    %218 = vst.msk [vmem:[#allocation2] sm:$0xf] %vm79, %v216
    %s219 = scalar_lea.vmem [#allocation6], 8
    %v220 = vld [vmem:[%s219] sm:$0xff]
    %v221 = vpack.c.bf16 %v220, %v220
    %v223 = vunpack.c.l.b16 %v221
    %v224 = vpack.c.b16 %v223, %v223
    %225 = vrot.lane.b32.xlu0 %v224, 32
    %v226 = vpop.permute.xlu0 %225
    %228 = vst.msk [vmem:[#allocation2] sm:$0xf] %vm89, %v226
    %v229 = vld [vmem:[#allocation2] sm:$0xf]
    %s230 = scalar_lea.vmem [#allocation9], 32
    %v231 = vld [vmem:[%s230] sm:$0xf]
    %v232 = vld [vmem:[%s230 + $0x4] sm:$0xf]
    %v233 = vld [vmem:[%s230 + $0x8] sm:$0xf]
    %v234 = vld [vmem:[%s230 + $0xc] sm:$0xf]
    %v235 = vld [vmem:[%s230 + $0x10] sm:$0xf]
    %v236 = vld [vmem:[%s230 + $0x14] sm:$0xf]
    %v237 = vld [vmem:[%s230 + $0x18] sm:$0xf]
    %v238 = vld [vmem:[%s230 + $0x1c] sm:$0xf]
    %s239 = scalar_lea.vmem %s4, 1
    %v240 = vld [vmem:[%s239] sm:$0x1]
    %v242 = vlaneseq
    %v243 = vshrl.u32 %v242, 7
    %v244 = vsub.s32 0, %v243
    %v245 = vrot.slane %v240, %v244
    %v255 = vunpack.c.l.b16 %v231
    %v256 = vunpack.c.l.b16 %v232
    %v257 = vunpack.c.l.b16 %v233
    %v258 = vunpack.c.l.b16 %v234
    %v259 = vunpack.c.l.b16 %v235
    %v260 = vunpack.c.l.b16 %v236
    %v261 = vunpack.c.l.b16 %v237
    %v262 = vunpack.c.l.b16 %v238
    %v263 = vpack.c.b16 %v256, %v255
    %v264 = vpack.c.b16 %v258, %v257
    %v265 = vpack.c.b16 %v260, %v259
    %v266 = vpack.c.b16 %v262, %v261
    %v272 = vsel %vm131, %v229, 0
    %274 = vmatprep.subr.bf16.mxu0 0
    %275 = vmatpush1.bf16.msra.mxu0 0
    %276 = vmatprep.subr.bf16.mxu0 0
    %277 = vmatpush1.bf16.msra.mxu0 0
    %278 = vmatprep.subr.bf16.mxu0 0
    %279 = vmatpush1.bf16.msra.mxu0 0
    %280 = vmatprep.subr.bf16.mxu0 0
    %281 = vmatpush1.bf16.msra.mxu0 0
    %282 = vmatprep.subr.bf16.mxu0 0
    %283 = vmatpush1.bf16.msra.mxu0 %v266
    %284 = vmatprep.subr.bf16.mxu0 0
    %285 = vmatpush1.bf16.msra.mxu0 %v265
    %286 = vmatprep.subr.bf16.mxu0 0
    %287 = vmatpush1.bf16.msra.mxu0 %v264
    %288 = vmatprep.subr.bf16.mxu0 0
    %289 = vmatpush1.bf16.msra.mxu0 %v263
    %290 = vmatprep.subr.bf16.mxu0 0
    %291 = vmatpush2.bf16.msra.mxu0 0
    %292 = vmatprep.subr.bf16.mxu0 0
    %293 = vmatpush2.bf16.msra.mxu0 0
    %294 = vmatprep.subr.bf16.mxu0 0
    %295 = vmatpush2.bf16.msra.mxu0 0
    %296 = vmatprep.subr.bf16.mxu0 0
    %297 = vmatpush2.bf16.msra.mxu0 0
    %298 = vmatprep.subr.bf16.mxu0 0
    %299 = vmatpush2.bf16.msra.mxu0 0
    %300 = vmatprep.subr.bf16.mxu0 0
    %301 = vmatpush2.bf16.msra.mxu0 0
    %302 = vmatprep.subr.bf16.mxu0 0
    %303 = vmatpush2.bf16.msra.mxu0 0
    %304 = vmatprep.subr.bf16.mxu0 0
    %305 = vmatpush2.bf16.msra.mxu0 0
    %306 = vmatprep.mubr.bf16.mxu0 0
    %307 = vmatmul.mubr.bf16.gmra.mxu0 %v272
    %v308 = vpop.f32.mrf.mxu0
    %v309 = vadd.f32 %v245, %v308
    %v310 = vpop.f32.mrf.mxu0
    %v311 = vpop.f32.mrf.mxu0
    %v312 = vpop.f32.mrf.mxu0
    %313 = vdwg.mxu0
    %v314 = vxor.u32 %v309, 2147483648
    %v315 = vmul.f32 %v314, 1.442695
    %v316 = vpow.pop %v315
    %v317 = vadd.f32 %v316, 1.0
    %v318 = vrcp.pop %v317
    %v319 = vmul.f32 1.0, %v318
    %v320 = vtanh.pop %v309
    %s321 = scalar_lea.vmem [#allocation8], 8
    %v322 = vld [vmem:[%s321] sm:$0xff]
    %324 = vrot.lane.b32.xlu0 %v322, 32
    %v325 = vpop.permute.xlu0 %324
    %v327 = vmul.f32 %v319, %v325
    %329 = vrot.lane.b32.xlu0 %v320, 64
    %v330 = vpop.permute.xlu0 %329
    %v332 = vmul.f32 %v319, %v330
    %334 = vrot.lane.b32.xlu0 %v332, 32
    %v335 = vpop.permute.xlu0 %334
    %v337 = vadd.f32 %v327, %v335
    %v338 = vtanh.pop %v337
    %340 = vrot.lane.b32.xlu0 %v338, 64
    %v341 = vpop.permute.xlu0 %340
    %v343 = vmul.f32 %v319, %v341
    %345 = vrot.lane.b32.xlu0 %v343, 32
    %v346 = vpop.permute.xlu0 %345
    %v348 = vsel %vm208, %v346, %v337
    %s349 = scalar_lea.vmem %s6, 8
    %350 = vst.msk [vmem:[%s349] sm:$0xff] %vm131, %v348
    %v351 = vpack.c.bf16 %v343, %v343
    %v353 = vunpack.c.l.b16 %v351
    %v354 = vpack.c.b16 %v353, %v353
    %355 = vrot.lane.b32.xlu0 %v354, 32
    %v356 = vpop.permute.xlu0 %355
    %358 = vst.msk [vmem:[#allocation2] sm:$0xf] %vm79, %v356
    %s359 = scalar_lea.vmem [#allocation6], 16
    %v360 = vld [vmem:[%s359] sm:$0xff]
    %v361 = vpack.c.bf16 %v360, %v360
    %v363 = vunpack.c.l.b16 %v361
    %v364 = vpack.c.b16 %v363, %v363
    %365 = vrot.lane.b32.xlu0 %v364, 32
    %v366 = vpop.permute.xlu0 %365
    %368 = vst.msk [vmem:[#allocation2] sm:$0xf] %vm89, %v366
    %v369 = vld [vmem:[#allocation2] sm:$0xf]
    %s370 = scalar_lea.vmem [#allocation9], 64
    %v371 = vld [vmem:[%s370] sm:$0xf]
    %v372 = vld [vmem:[%s370 + $0x4] sm:$0xf]
    %v373 = vld [vmem:[%s370 + $0x8] sm:$0xf]
    %v374 = vld [vmem:[%s370 + $0xc] sm:$0xf]
    %v375 = vld [vmem:[%s370 + $0x10] sm:$0xf]
    %v376 = vld [vmem:[%s370 + $0x14] sm:$0xf]
    %v377 = vld [vmem:[%s370 + $0x18] sm:$0xf]
    %v378 = vld [vmem:[%s370 + $0x1c] sm:$0xf]
    %s379 = scalar_lea.vmem %s4, 2
    %v380 = vld [vmem:[%s379] sm:$0x1]
    %v382 = vlaneseq
    %v383 = vshrl.u32 %v382, 7
    %v384 = vsub.s32 0, %v383
    %v385 = vrot.slane %v380, %v384
    %v395 = vunpack.c.l.b16 %v371
    %v396 = vunpack.c.l.b16 %v372
    %v397 = vunpack.c.l.b16 %v373
    %v398 = vunpack.c.l.b16 %v374
    %v399 = vunpack.c.l.b16 %v375
    %v400 = vunpack.c.l.b16 %v376
    %v401 = vunpack.c.l.b16 %v377
    %v402 = vunpack.c.l.b16 %v378
    %v403 = vpack.c.b16 %v396, %v395
    %v404 = vpack.c.b16 %v398, %v397
    %v405 = vpack.c.b16 %v400, %v399
    %v406 = vpack.c.b16 %v402, %v401
    %v412 = vsel %vm131, %v369, 0
    %414 = vmatprep.subr.bf16.mxu0 0
    %415 = vmatpush1.bf16.msra.mxu0 0
    %416 = vmatprep.subr.bf16.mxu0 0
    %417 = vmatpush1.bf16.msra.mxu0 0
    %418 = vmatprep.subr.bf16.mxu0 0
    %419 = vmatpush1.bf16.msra.mxu0 0
    %420 = vmatprep.subr.bf16.mxu0 0
    %421 = vmatpush1.bf16.msra.mxu0 0
    %422 = vmatprep.subr.bf16.mxu0 0
    %423 = vmatpush1.bf16.msra.mxu0 %v406
    %424 = vmatprep.subr.bf16.mxu0 0
    %425 = vmatpush1.bf16.msra.mxu0 %v405
    %426 = vmatprep.subr.bf16.mxu0 0
    %427 = vmatpush1.bf16.msra.mxu0 %v404
    %428 = vmatprep.subr.bf16.mxu0 0
    %429 = vmatpush1.bf16.msra.mxu0 %v403
    %430 = vmatprep.subr.bf16.mxu0 0
    %431 = vmatpush2.bf16.msra.mxu0 0
    %432 = vmatprep.subr.bf16.mxu0 0
    %433 = vmatpush2.bf16.msra.mxu0 0
    %434 = vmatprep.subr.bf16.mxu0 0
    %435 = vmatpush2.bf16.msra.mxu0 0
    %436 = vmatprep.subr.bf16.mxu0 0
    %437 = vmatpush2.bf16.msra.mxu0 0
    %438 = vmatprep.subr.bf16.mxu0 0
    %439 = vmatpush2.bf16.msra.mxu0 0
    %440 = vmatprep.subr.bf16.mxu0 0
    %441 = vmatpush2.bf16.msra.mxu0 0
    %442 = vmatprep.subr.bf16.mxu0 0
    %443 = vmatpush2.bf16.msra.mxu0 0
    %444 = vmatprep.subr.bf16.mxu0 0
    %445 = vmatpush2.bf16.msra.mxu0 0
    %446 = vmatprep.mubr.bf16.mxu0 0
    %447 = vmatmul.mubr.bf16.gmra.mxu0 %v412
    %v448 = vpop.f32.mrf.mxu0
    %v449 = vadd.f32 %v385, %v448
    %v450 = vpop.f32.mrf.mxu0
    %v451 = vpop.f32.mrf.mxu0
    %v452 = vpop.f32.mrf.mxu0
    %453 = vdwg.mxu0
    %v454 = vxor.u32 %v449, 2147483648
    %v455 = vmul.f32 %v454, 1.442695
    %v456 = vpow.pop %v455
    %v457 = vadd.f32 %v456, 1.0
    %v458 = vrcp.pop %v457
    %v459 = vmul.f32 1.0, %v458
    %v460 = vtanh.pop %v449
    %s461 = scalar_lea.vmem [#allocation8], 16
    %v462 = vld [vmem:[%s461] sm:$0xff]
    %464 = vrot.lane.b32.xlu0 %v462, 32
    %v465 = vpop.permute.xlu0 %464
    %v467 = vmul.f32 %v459, %v465
    %469 = vrot.lane.b32.xlu0 %v460, 64
    %v470 = vpop.permute.xlu0 %469
    %v472 = vmul.f32 %v459, %v470
    %474 = vrot.lane.b32.xlu0 %v472, 32
    %v475 = vpop.permute.xlu0 %474
    %v477 = vadd.f32 %v467, %v475
    %v478 = vtanh.pop %v477
    %480 = vrot.lane.b32.xlu0 %v478, 64
    %v481 = vpop.permute.xlu0 %480
    %v483 = vmul.f32 %v459, %v481
    %485 = vrot.lane.b32.xlu0 %v483, 32
    %v486 = vpop.permute.xlu0 %485
    %v488 = vsel %vm208, %v486, %v477
    %s489 = scalar_lea.vmem %s6, 16
    %490 = vst.msk [vmem:[%s489] sm:$0xff] %vm131, %v488
    %v491 = vpack.c.bf16 %v483, %v483
    %v493 = vunpack.c.l.b16 %v491
    %v494 = vpack.c.b16 %v493, %v493
    %495 = vrot.lane.b32.xlu0 %v494, 32
    %v496 = vpop.permute.xlu0 %495
    %498 = vst.msk [vmem:[#allocation2] sm:$0xf] %vm79, %v496
    %499 = vst.msk [vmem:[#allocation11] sm:$0xff] %vm208, %v486
    // Predicated region
    $region38: #{decoder_tsv_forward.1} parent=1 // pred_check
      _
    $region39: #{decoder_tsv_forward.1} parent=1 // pred_check_branch
      %501 = sbr.rel (0) target = $region41
    $region40: #{decoder_tsv_forward.1} parent=1 // pred_region
      %s503 = ssub.s32 128, 128
      %504 = vsyncadd [#allocation5], %s503
      %s506 = sshll.u32 [#allocation11], 4
      %s507 = int_to_ptr.vmem [resolvable:$true] %s506
      %509 = dma.vmem_to_hbm [thread:$0]  %s507, 128, %s5, [#allocation5]
    $region41: #{decoder_tsv_forward.1} parent=1 // pred_fallthru
      _
    // Predicated region
    $region42: #{decoder_tsv_forward.1} parent=1 // pred_check
      _
    $region43: #{decoder_tsv_forward.1} parent=1 // pred_check_branch
      %511 = sbr.rel (0) target = $region45
    $region44: #{decoder_tsv_forward.1} parent=1 // pred_region
      _
    $region45: #{decoder_tsv_forward.1} parent=1 // pred_fallthru
      _
    // Predicated region
    $region46: #{decoder_tsv_forward.1} parent=1 // pred_check
      _
    $region47: #{decoder_tsv_forward.1} parent=1 // pred_check_branch
      %513 = sbr.rel (0) target = $region49
    $region48: #{decoder_tsv_forward.1} parent=1 // pred_region
      %514 = dma.done [#allocation5], 128
    $region49: #{decoder_tsv_forward.1} parent=1 // pred_fallthru
      _
    // Predicated region
    $region50: #{decoder_tsv_forward.1} parent=1 // pred_check
      _
    $region51: #{decoder_tsv_forward.1} parent=1 // pred_check_branch
      %516 = sbr.rel (0) target = $region53
    $region52: #{decoder_tsv_forward.1} parent=1 // pred_region
      _
    $region53: #{decoder_tsv_forward.1} parent=1 // pred_fallthru
      _
    %517 = vsyncpa [#allocation4], 1
    %518 = vsyncpa [#allocation7], 1
    %519 = vsyncpa [#allocation10], 1
    %520 = vsyncpa [#allocation5], 1

</llo_original>
